<compile_context>
chip_gen: v7x
topology: tpu7x:2x2x1
jax: 0.10.0
libtpu: 0.0.40
codegen_flags: <defaults>
</compile_context>

<pallas_src>
import jax
import jax.numpy as jnp
from jax.experimental import pallas as pl
from jax.experimental.pallas import tpu as pltpu

LEAKY_SLOPE = 0.01      # torch.nn.LeakyReLU default negative_slope
_SUBLANE = 8            # f32 vreg sublane count


def _round_up(n, m):
    return ((n + m - 1) // m) * m


def _vmem_capacity_bytes():
    """Generation-aware VMEM capacity; falls back to v7x's 64 MiB (smallest)."""
    try:
        info = pltpu.get_tpu_info()
        cap = int(getattr(info, "vmem_capacity_bytes", 0) or 0)
        if cap > 0:
            return cap
    except Exception:
        pass
    return 64 * 1024 * 1024


def multinomial_classifier_forward(x, params, *, batch_tile=1024,
                                   compute_dtype=None):
    """Fused MLP + softmax forward pass.

    Args:
      x: [B, D_in] float32 input batch (class dim = last axis, i.e. torch dim=1).
      params: list of (W, b) with W: [D_in_i, D_out_i], b: [D_out_i] (float32).
      batch_tile: target rows per grid step (auto-shrunk to fit VMEM).
      compute_dtype: MXU operand dtype; None = auto (f32 for small models,
        bf16 once total weight elements exceed 2^20).

    Returns:
      probs: [B, num_classes] float32, rows sum to 1.
    """
    B, d_in = x.shape
    n_layers = len(params)
    num_classes = params[-1][0].shape[1]
    widths = [d_in] + [w.shape[1] for w, _ in params]

    if compute_dtype is None:
        total_w = sum(int(w.size) for w, _ in params)
        compute_dtype = jnp.float32 if total_w <= (1 << 20) else jnp.bfloat16
    cbytes = jnp.dtype(compute_dtype).itemsize

    # ---- generation-aware VMEM budgeting -----------------------------------
    vmem_cap = _vmem_capacity_bytes()          # ~128 MiB v5e/v6e, ~64 MiB v7x
    budget = int(vmem_cap * 0.70)
    vmem_limit = int(vmem_cap * 0.85)

    w_bytes = sum(int(w.size) * cbytes + int(b.size) * 4 for w, b in params)

    def tile_bytes(t, w_buffers):
        # resident weights/biases (x buffer count) + double-buffered x / out
        # blocks + widest live (h, z) activation pair + softmax temporaries.
        io = 2 * t * d_in * 4 + 2 * t * num_classes * 4
        act = max(t * (widths[i] * cbytes + widths[i + 1] * 4)
                  for i in range(n_layers))
        act += 2 * t * num_classes * 4
        return w_bytes * w_buffers + io + act

    # ---- batch tile selection ------------------------------------------------
    tb0 = min(batch_tile, B)
    if B > 256:
        # keep >= 2 batch tiles so the "parallel" axis can split across v7x's 2 TCs
        tb0 = min(tb0, -(-B // 2))
    if tb0 < B:
        tb0 = _round_up(tb0, _SUBLANE)

    def pick_tb(w_buffers):
        t = tb0
        while t > _SUBLANE and tile_bytes(t, w_buffers) > budget:
            t = _round_up(max(t // 2, _SUBLANE), _SUBLANE)
        return t

    # Single-buffer the resident weights only when double-buffering them would
    # eat a large chunk of the budget (wide models, relevant on v7x's 64 MiB).
    single_buffer_weights = (2 * w_bytes) > (budget // 2)
    w_buffers = 1 if single_buffer_weights else 2
    tb = pick_tb(w_buffers)
    num_tiles = pl.cdiv(B, tb)

    # ---- pallas_call builder -------------------------------------------------
    def build(use_single_buffer):
        spec_kwargs = {"pipeline_mode": pl.Buffered(1)} if use_single_buffer else {}

        flat_inputs = [x]                                  # f32; cast in-kernel
        in_specs = [pl.BlockSpec((tb, d_in), lambda i: (i, 0))]
        for w, b in params:
            d_o = w.shape[1]
            flat_inputs.append(w.astype(compute_dtype))
            flat_inputs.append(b.astype(jnp.float32).reshape(1, d_o))
            # Constant index_map -> weights/biases resident in VMEM, DMA'd once.
            in_specs.append(pl.BlockSpec(w.shape, lambda i: (0, 0), **spec_kwargs))
            in_specs.append(pl.BlockSpec((1, d_o), lambda i: (0, 0), **spec_kwargs))

        def kernel(*refs):
            x_ref, out_ref = refs[0], refs[-1]
            h = x_ref[...].astype(compute_dtype)           # in-kernel cast (hidden under DMA)
            for i in range(n_layers):
                w_ref = refs[1 + 2 * i]
                b_ref = refs[2 + 2 * i]
                z = jnp.dot(h, w_ref[...], preferred_element_type=jnp.float32)
                z = z + b_ref[...]                         # f32 accumulate + bias
                if i < n_layers - 1:
                    z = jnp.maximum(z, LEAKY_SLOPE * z)    # LeakyReLU (vmul + vmax)
                    h = z.astype(compute_dtype)
                else:
                    h = z                                  # f32 logits
            # softmax over the class axis, exact normalization
            m = jnp.max(h, axis=-1, keepdims=True)
            e = jnp.exp(h - m)
            out_ref[...] = (e / jnp.sum(e, axis=-1, keepdims=True)).astype(out_ref.dtype)

        flops = 2 * B * sum(widths[i] * widths[i + 1] for i in range(n_layers))
        bytes_accessed = (B * d_in * 4) + w_bytes + (B * num_classes * 4)
        cost = pl.CostEstimate(flops=flops,
                               transcendentals=B * num_classes,
                               bytes_accessed=bytes_accessed)

        return pl.pallas_call(
            kernel,
            out_shape=jax.ShapeDtypeStruct((B, num_classes), jnp.float32),
            grid_spec=pltpu.PrefetchScalarGridSpec(
                num_scalar_prefetch=0,
                grid=(num_tiles,),
                in_specs=in_specs,
                out_specs=pl.BlockSpec((tb, num_classes), lambda i: (i, 0)),
            ),
            compiler_params=pltpu.CompilerParams(
                dimension_semantics=("parallel",),   # batch tiles shard across v7x's 2 TCs
                vmem_limit_bytes=vmem_limit,
            ),
            cost_estimate=cost,
        )(*flat_inputs)

    if single_buffer_weights:
        try:
            return build(True)
        except Exception:
            # Installed Pallas may not accept pipeline_mode=Buffered(1);
            # fall back to default (double-buffered, still DMA'd-once) weights.
            return build(False)
    return build(False)


# ------------------------- reference & init ----------------------------------
def reference_forward(x, params):
    """Pure-f32 plain-JAX reference matching the PyTorch semantics."""
    h = x
    n = len(params)
    for i, (w, b) in enumerate(params):
        h = jnp.dot(h, w, preferred_element_type=jnp.float32) + b
        if i < n - 1:
            h = jnp.where(h > 0, h, LEAKY_SLOPE * h)
    return jax.nn.softmax(h, axis=1)


def init_params(key, layer_sizes):
    """Deterministic torch.nn.Linear-like init (uniform +/- 1/sqrt(fan_in))."""
    params = []
    for d_in, d_out in zip(layer_sizes[:-1], layer_sizes[1:]):
        key, kw, kb = jax.random.split(key, 3)
        bound = 1.0 / jnp.sqrt(jnp.float32(d_in))
        w = jax.random.uniform(kw, (d_in, d_out), jnp.float32, -bound, bound)
        b = jax.random.uniform(kb, (d_out,), jnp.float32, -bound, bound)
        params.append((w, b))
    return params


if __name__ == "__main__":
    # layers = [input_dim, hidden..., n_classes], small shapes per the module.
    layers = [32, 64, 16, 10]
    batch = 8

    key = jax.random.PRNGKey(0)
    key, kx = jax.random.split(key)
    x = jax.random.normal(kx, (batch, layers[0]), jnp.float32)
    params = init_params(key, layers)

    probs = multinomial_classifier_forward(x, params)
    probs = jax.block_until_ready(probs)

    assert probs.shape == (batch, layers[-1])

    # Match the PyTorch-equivalent f32 reference (kernel runs f32 here).
    ref = reference_forward(x, params)
    max_err = float(jnp.max(jnp.abs(probs - ref)))
    assert jnp.allclose(probs, ref, atol=2e-3, rtol=2e-3), max_err

    # Rows must sum to 1 (exact normalization in-kernel).
    assert jnp.allclose(jnp.sum(probs, axis=1), 1.0, atol=1e-3)

    # prediction_hard equivalent (argmax over class dim) is plain JAX glue.
    _ = jnp.argmax(probs, axis=1)

    # TODO(synk): batch_norm=True / dropout paths of FullyConnectedBlock are not
    # implemented (module defaults disable them).

    print("KERNEL_OK")
</pallas_src>

<mosaic_0001>
module attributes {stable_mosaic.version = 11 : i64} {
  func.func @kernel(%arg0: i32, %arg1: memref<8x32xf32, #tpu.memory_space<vmem>>, %arg2: memref<32x64xf32, #tpu.memory_space<vmem>>, %arg3: memref<1x64xf32, #tpu.memory_space<vmem>>, %arg4: memref<64x16xf32, #tpu.memory_space<vmem>>, %arg5: memref<1x16xf32, #tpu.memory_space<vmem>>, %arg6: memref<16x10xf32, #tpu.memory_space<vmem>>, %arg7: memref<1x10xf32, #tpu.memory_space<vmem>>, %arg8: memref<8x10xf32, #tpu.memory_space<vmem>>) attributes {dimension_semantics = [#tpu.dimension_semantics<parallel>], iteration_bounds = array<i64: 1>, scalar_prefetch = 0 : i64, scratch_operands = 0 : i64, tpu.core_type = #tpu.core_type<tc>, window_params = [{transform_indices = @transform_0, window_bounds = array<i64: 8, 32>}, {pipeline_mode = #tpu.pipeline_mode<synchronous>, transform_indices = @transform_1, window_bounds = array<i64: 32, 64>}, {pipeline_mode = #tpu.pipeline_mode<synchronous>, transform_indices = @transform_2, window_bounds = array<i64: 1, 64>}, {pipeline_mode = #tpu.pipeline_mode<synchronous>, transform_indices = @transform_3, window_bounds = array<i64: 64, 16>}, {pipeline_mode = #tpu.pipeline_mode<synchronous>, transform_indices = @transform_4, window_bounds = array<i64: 1, 16>}, {pipeline_mode = #tpu.pipeline_mode<synchronous>, transform_indices = @transform_5, window_bounds = array<i64: 16, 10>}, {pipeline_mode = #tpu.pipeline_mode<synchronous>, transform_indices = @transform_6, window_bounds = array<i64: 1, 10>}, {transform_indices = @transform_7, window_bounds = array<i64: 8, 10>}]} {
    %c0 = arith.constant 0 : index
    %c0_0 = arith.constant 0 : index
    %0 = vector.load %arg1[%c0, %c0_0] : memref<8x32xf32, #tpu.memory_space<vmem>>, vector<8x32xf32>
    %c0_1 = arith.constant 0 : index
    %c0_2 = arith.constant 0 : index
    %1 = vector.load %arg2[%c0_1, %c0_2] : memref<32x64xf32, #tpu.memory_space<vmem>>, vector<32x64xf32>
    %cst = arith.constant dense<0.000000e+00> : vector<8x64xf32>
    %2 = tpu.matmul %0, %1, %cst {dimension_numbers = #tpu.dot_dimension_numbers<[1], [0], [0], [1], [0, 0, 1, 1], [], []>} : vector<8x32xf32>, vector<32x64xf32>, vector<8x64xf32> -> vector<8x64xf32>
    %c0_3 = arith.constant 0 : index
    %c0_4 = arith.constant 0 : index
    %3 = vector.load %arg3[%c0_3, %c0_4] : memref<1x64xf32, #tpu.memory_space<vmem>>, vector<1x64xf32>
    %4 = vector.broadcast %3 : vector<1x64xf32> to vector<8x64xf32>
    %5 = arith.addf %2, %4 : vector<8x64xf32>
    %cst_5 = arith.constant 0.00999999977 : f32
    %6 = vector.broadcast %cst_5 : f32 to vector<8x64xf32>
    %7 = arith.mulf %6, %5 : vector<8x64xf32>
    %8 = arith.maximumf %5, %7 : vector<8x64xf32>
    %c0_6 = arith.constant 0 : index
    %c0_7 = arith.constant 0 : index
    %9 = vector.load %arg4[%c0_6, %c0_7] : memref<64x16xf32, #tpu.memory_space<vmem>>, vector<64x16xf32>
    %cst_8 = arith.constant dense<0.000000e+00> : vector<8x16xf32>
    %10 = tpu.matmul %8, %9, %cst_8 {dimension_numbers = #tpu.dot_dimension_numbers<[1], [0], [0], [1], [0, 0, 1, 1], [], []>} : vector<8x64xf32>, vector<64x16xf32>, vector<8x16xf32> -> vector<8x16xf32>
    %c0_9 = arith.constant 0 : index
    %c0_10 = arith.constant 0 : index
    %11 = vector.load %arg5[%c0_9, %c0_10] : memref<1x16xf32, #tpu.memory_space<vmem>>, vector<1x16xf32>
    %12 = vector.broadcast %11 : vector<1x16xf32> to vector<8x16xf32>
    %13 = arith.addf %10, %12 : vector<8x16xf32>
    %cst_11 = arith.constant 0.00999999977 : f32
    %14 = vector.broadcast %cst_11 : f32 to vector<8x16xf32>
    %15 = arith.mulf %14, %13 : vector<8x16xf32>
    %16 = arith.maximumf %13, %15 : vector<8x16xf32>
    %c0_12 = arith.constant 0 : index
    %c0_13 = arith.constant 0 : index
    %17 = vector.load %arg6[%c0_12, %c0_13] : memref<16x10xf32, #tpu.memory_space<vmem>>, vector<16x10xf32>
    %cst_14 = arith.constant dense<0.000000e+00> : vector<8x10xf32>
    %18 = tpu.matmul %16, %17, %cst_14 {dimension_numbers = #tpu.dot_dimension_numbers<[1], [0], [0], [1], [0, 0, 1, 1], [], []>} : vector<8x16xf32>, vector<16x10xf32>, vector<8x10xf32> -> vector<8x10xf32>
    %c0_15 = arith.constant 0 : index
    %c0_16 = arith.constant 0 : index
    %19 = vector.load %arg7[%c0_15, %c0_16] : memref<1x10xf32, #tpu.memory_space<vmem>>, vector<1x10xf32>
    %20 = vector.broadcast %19 : vector<1x10xf32> to vector<8x10xf32>
    %21 = arith.addf %18, %20 : vector<8x10xf32>
    %cst_17 = arith.constant dense<0xFF800000> : vector<8xf32>
    %22 = vector.multi_reduction <maximumf>, %21, %cst_17 [1] : vector<8x10xf32> to vector<8xf32>
    %23 = vector.shape_cast %22 : vector<8xf32> to vector<8x1xf32>
    %24 = vector.broadcast %23 : vector<8x1xf32> to vector<8x10xf32>
    %25 = arith.subf %21, %24 : vector<8x10xf32>
    %26 = math.exp %25 : vector<8x10xf32>
    %cst_18 = arith.constant dense<0.000000e+00> : vector<8xf32>
    %27 = vector.multi_reduction <add>, %26, %cst_18 [1] : vector<8x10xf32> to vector<8xf32>
    %28 = vector.shape_cast %27 : vector<8xf32> to vector<8x1xf32>
    %29 = vector.broadcast %28 : vector<8x1xf32> to vector<8x10xf32>
    %30 = arith.divf %26, %29 : vector<8x10xf32>
    %c0_19 = arith.constant 0 : index
    %c0_20 = arith.constant 0 : index
    %31 = vector.load %arg8[%c0_19, %c0_20] : memref<8x10xf32, #tpu.memory_space<vmem>>, vector<8x10xf32>
    tpu.vector_store %arg8[%c0_19, %c0_20], %30 {strides = array<i32>} : memref<8x10xf32, #tpu.memory_space<vmem>>, vector<8x10xf32>,
    return
  }
  func.func @transform_0(%arg0: i32) -> (i32, i32) {
    %c0_i32 = arith.constant 0 : i32
    %c0_i32_0 = arith.constant 0 : i32
    return %arg0, %c0_i32 : i32, i32
  }
  func.func @transform_1(%arg0: i32) -> (i32, i32) {
    %c0_i32 = arith.constant 0 : i32
    %c0_i32_0 = arith.constant 0 : i32
    %c0_i32_1 = arith.constant 0 : i32
    return %c0_i32, %c0_i32_0 : i32, i32
  }
  func.func @transform_2(%arg0: i32) -> (i32, i32) {
    %c0_i32 = arith.constant 0 : i32
    %c0_i32_0 = arith.constant 0 : i32
    %c0_i32_1 = arith.constant 0 : i32
    return %c0_i32, %c0_i32_0 : i32, i32
  }
  func.func @transform_3(%arg0: i32) -> (i32, i32) {
    %c0_i32 = arith.constant 0 : i32
    %c0_i32_0 = arith.constant 0 : i32
    %c0_i32_1 = arith.constant 0 : i32
    return %c0_i32, %c0_i32_0 : i32, i32
  }
  func.func @transform_4(%arg0: i32) -> (i32, i32) {
    %c0_i32 = arith.constant 0 : i32
    %c0_i32_0 = arith.constant 0 : i32
    %c0_i32_1 = arith.constant 0 : i32
    return %c0_i32, %c0_i32_0 : i32, i32
  }
  func.func @transform_5(%arg0: i32) -> (i32, i32) {
    %c0_i32 = arith.constant 0 : i32
    %c0_i32_0 = arith.constant 0 : i32
    %c0_i32_1 = arith.constant 0 : i32
    return %c0_i32, %c0_i32_0 : i32, i32
  }
  func.func @transform_6(%arg0: i32) -> (i32, i32) {
    %c0_i32 = arith.constant 0 : i32
    %c0_i32_0 = arith.constant 0 : i32
    %c0_i32_1 = arith.constant 0 : i32
    return %c0_i32, %c0_i32_0 : i32, i32
  }
  func.func @transform_7(%arg0: i32) -> (i32, i32) {
    %c0_i32 = arith.constant 0 : i32
    %c0_i32_0 = arith.constant 0 : i32
    return %arg0, %c0_i32 : i32, i32
  }
}

</mosaic_0001>

<llo_original>
// kernel: tpu_custom_call.1
$region0: #{tpu_custom_call.1}
  #allocation0 [shape = 'u32[]', space=smem, size = 0x4, offset = 0x4, fixed_abs, tag = 'smem constant byte address 0x4 - core index']
  #allocation1 [shape = 'u32[144,128]{1,0:T(1,128)}', space=vmem, size = 0x12000, scoped, tag = 'internal scratch']
  %s0 = inlined_call_operand.vmem [shape: f32[8,32], index: 0, kind: input, shape index: {}]
  %s1 = inlined_call_operand.vmem [shape: f32[32,64], index: 1, kind: input, shape index: {}]
  %s2 = inlined_call_operand.vmem [shape: f32[1,64], index: 2, kind: input, shape index: {}]
  %s3 = inlined_call_operand.vmem [shape: f32[64,16], index: 3, kind: input, shape index: {}]
  %s4 = inlined_call_operand.vmem [shape: f32[1,16], index: 4, kind: input, shape index: {}]
  %s5 = inlined_call_operand.vmem [shape: f32[16,10], index: 5, kind: input, shape index: {}]
  %s6 = inlined_call_operand.vmem [shape: f32[1,10], index: 6, kind: input, shape index: {}]
  %s7 = inlined_call_operand.hbm [shape: f32[8,10], index: 7, kind: output, shape index: {}]
  %s8 = sld [smem:[#allocation0]]
  $region38: #{tpu_custom_call.1} parent=0
    _
  %s10 = ssub.s32 1, %s8
  %s11 = scalar_select 0, %s10, %s8
  $region1: #{tpu_custom_call.1} parent=0
    #allocation2 [shape = 'u8[4096]{0}', space=vmem, size = 0x1000, scoped, tag = 'output window, operand 0, single buffered']
    #allocation3 [shape = 's32[1]{0}', space=sflag, size = 0x4, scoped, tag = 'scoped memory for tpu_custom_call.1']
    %12 = vsyncpa [#allocation3], 0
    // Predicated region
    $region2: #{tpu_custom_call.1} parent=1 // pred_check
      _
    $region3: #{tpu_custom_call.1} parent=1 // pred_check_branch
      %14 = sbr.rel (0) target = $region5
    $region4: #{tpu_custom_call.1} parent=1 // pred_region
      _
    $region5: #{tpu_custom_call.1} parent=1 // pred_fallthru
      _
    // Predicated region
    $region6: #{tpu_custom_call.1} parent=1 // pred_check
      _
    $region7: #{tpu_custom_call.1} parent=1 // pred_check_branch
      %16 = sbr.rel (0) target = $region9
    $region8: #{tpu_custom_call.1} parent=1 // pred_region
      _
    $region9: #{tpu_custom_call.1} parent=1 // pred_fallthru
      _
    // Predicated region
    $region10: #{tpu_custom_call.1} parent=1 // pred_check
      _
    $region11: #{tpu_custom_call.1} parent=1 // pred_check_branch
      %18 = sbr.rel (0) target = $region13
    $region12: #{tpu_custom_call.1} parent=1 // pred_region
      _
    $region13: #{tpu_custom_call.1} parent=1 // pred_fallthru
      _
    // Predicated region
    $region14: #{tpu_custom_call.1} parent=1 // pred_check
      _
    $region15: #{tpu_custom_call.1} parent=1 // pred_check_branch
      %20 = sbr.rel (0) target = $region17
    $region16: #{tpu_custom_call.1} parent=1 // pred_region
      _
    $region17: #{tpu_custom_call.1} parent=1 // pred_fallthru
      _
    // Predicated region
    $region18: #{tpu_custom_call.1} parent=1 // pred_check
      _
    $region19: #{tpu_custom_call.1} parent=1 // pred_check_branch
      %22 = sbr.rel (0) target = $region21
    $region20: #{tpu_custom_call.1} parent=1 // pred_region
      _
    $region21: #{tpu_custom_call.1} parent=1 // pred_fallthru
      _
    // Predicated region
    $region22: #{tpu_custom_call.1} parent=1 // pred_check
      _
    $region23: #{tpu_custom_call.1} parent=1 // pred_check_branch
      %24 = sbr.rel (0) target = $region25
    $region24: #{tpu_custom_call.1} parent=1 // pred_region
      _
    $region25: #{tpu_custom_call.1} parent=1 // pred_fallthru
      _
    // Predicated region
    $region26: #{tpu_custom_call.1} parent=1 // pred_check
      _
    $region27: #{tpu_custom_call.1} parent=1 // pred_check_branch
      %26 = sbr.rel (0) target = $region29
    $region28: #{tpu_custom_call.1} parent=1 // pred_region
      _
    $region29: #{tpu_custom_call.1} parent=1 // pred_fallthru
      _
    %v27 = vld [vmem:[%s0] sm:$0xff]
    %v28 = vld [vmem:[%s1] sm:$0xff]
    %v29 = vld [vmem:[%s1 + $0x8] sm:$0xff]
    %v30 = vld [vmem:[%s1 + $0x10] sm:$0xff]
    %v31 = vld [vmem:[%s1 + $0x18] sm:$0xff]
    %v32 = vld [vmem:[%s2] sm:$0x1]
    %v34 = vlaneseq
    %v35 = vshrl.u32 %v34, 7
    %v36 = vsub.s32 0, %v35
    %v37 = vrot.slane %v32, %v36
    %vm39 = vcmask 261120
    %v41 = vsel %vm39, %v27, 0
    %43 = vmatprep.subr.mxu0 0.0
    %44 = vmatpush1.msra.mxu0 %v28
    %45 = vmatprep.subr.mxu0 0.0
    %46 = vmatpush1.msra.mxu0 %v29
    %47 = vmatprep.subr.mxu0 0.0
    %48 = vmatpush1.msra.mxu0 %v30
    %49 = vmatprep.subr.mxu0 0.0
    %50 = vmatpush1.msra.mxu0 %v31
    %51 = vmatprep.subr.mxu0 0.0
    %52 = vmatpush1.msra.mxu0 0.0
    %53 = vmatprep.subr.mxu0 0.0
    %54 = vmatpush1.msra.mxu0 0.0
    %55 = vmatprep.subr.mxu0 0.0
    %56 = vmatpush1.msra.mxu0 0.0
    %57 = vmatprep.subr.mxu0 0.0
    %58 = vmatpush1.msra.mxu0 0.0
    %59 = vmatprep.subr.mxu0 0.0
    %60 = vmatpush1.msra.mxu0 0.0
    %61 = vmatprep.subr.mxu0 0.0
    %62 = vmatpush1.msra.mxu0 0.0
    %63 = vmatprep.subr.mxu0 0.0
    %64 = vmatpush1.msra.mxu0 0.0
    %65 = vmatprep.subr.mxu0 0.0
    %66 = vmatpush1.msra.mxu0 0.0
    %67 = vmatprep.subr.mxu0 0.0
    %68 = vmatpush1.msra.mxu0 0.0
    %69 = vmatprep.subr.mxu0 0.0
    %70 = vmatpush1.msra.mxu0 0.0
    %71 = vmatprep.subr.mxu0 0.0
    %72 = vmatpush1.msra.mxu0 0.0
    %73 = vmatprep.subr.mxu0 0.0
    %74 = vmatpush1.msra.mxu0 0.0
    %75 = vmatprep.subr.mxu0 0.0
    %76 = vmatpush1.msra.mxu0 0.0
    %77 = vmatprep.subr.mxu0 0.0
    %78 = vmatpush1.msra.mxu0 0.0
    %79 = vmatprep.subr.mxu0 0.0
    %80 = vmatpush1.msra.mxu0 0.0
    %81 = vmatprep.subr.mxu0 0.0
    %82 = vmatpush1.msra.mxu0 0.0
    %83 = vmatprep.subr.mxu0 0.0
    %84 = vmatpush1.msra.mxu0 0.0
    %85 = vmatprep.subr.mxu0 0.0
    %86 = vmatpush1.msra.mxu0 0.0
    %87 = vmatprep.subr.mxu0 0.0
    %88 = vmatpush1.msra.mxu0 0.0
    %89 = vmatprep.subr.mxu0 0.0
    %90 = vmatpush1.msra.mxu0 0.0
    %91 = vmatprep.subr.mxu0 0.0
    %92 = vmatpush1.msra.mxu0 0.0
    %93 = vmatprep.subr.mxu0 0.0
    %94 = vmatpush1.msra.mxu0 0.0
    %95 = vmatprep.subr.mxu0 0.0
    %96 = vmatpush1.msra.mxu0 0.0
    %97 = vmatprep.subr.mxu0 0.0
    %98 = vmatpush1.msra.mxu0 0.0
    %99 = vmatprep.subr.mxu0 0.0
    %100 = vmatpush1.msra.mxu0 0.0
    %101 = vmatprep.subr.mxu0 0.0
    %102 = vmatpush1.msra.mxu0 0.0
    %103 = vmatprep.subr.mxu0 0.0
    %104 = vmatpush1.msra.mxu0 0.0
    %105 = vmatprep.subr.mxu0 0.0
    %106 = vmatpush1.msra.mxu0 0.0
    %107 = vmatprep.mubr.f32.mxu0 0.0
    %108 = vmatmul.mubr.f32.gmra.mrb[0].mxu0 %v41
    %v109 = vpop.f32.mrb[0].mxu0
    %v110 = vadd.f32 %v37, %v109
    %v111 = vpop.f32.mrb[0].mxu0
    %112 = vdwg.mxu0
    %v113 = vmul.f32 %v110, 0.01
    %v114 = vmax.f32 %v110, %v113
    %v115 = vld [vmem:[%s3] sm:$0xff]
    %v116 = vld [vmem:[%s3 + $0x8] sm:$0xff]
    %v117 = vld [vmem:[%s3 + $0x10] sm:$0xff]
    %v118 = vld [vmem:[%s3 + $0x18] sm:$0xff]
    %v119 = vld [vmem:[%s3 + $0x20] sm:$0xff]
    %v120 = vld [vmem:[%s3 + $0x28] sm:$0xff]
    %v121 = vld [vmem:[%s3 + $0x30] sm:$0xff]
    %v122 = vld [vmem:[%s3 + $0x38] sm:$0xff]
    %v123 = vld [vmem:[%s4] sm:$0x1]
    %v125 = vlaneseq
    %v126 = vshrl.u32 %v125, 7
    %v127 = vsub.s32 0, %v126
    %v128 = vrot.slane %v123, %v127
    %vm130 = vcmask 523264
    %v132 = vsel %vm130, %v114, 0
    %134 = vmatprep.subr.mxu0 0.0
    %135 = vmatpush1.msra.mxu0 %v115
    %136 = vmatprep.subr.mxu0 0.0
    %137 = vmatpush1.msra.mxu0 %v116
    %138 = vmatprep.subr.mxu0 0.0
    %139 = vmatpush1.msra.mxu0 %v117
    %140 = vmatprep.subr.mxu0 0.0
    %141 = vmatpush1.msra.mxu0 %v118
    %142 = vmatprep.subr.mxu0 0.0
    %143 = vmatpush1.msra.mxu0 %v119
    %144 = vmatprep.subr.mxu0 0.0
    %145 = vmatpush1.msra.mxu0 %v120
    %146 = vmatprep.subr.mxu0 0.0
    %147 = vmatpush1.msra.mxu0 %v121
    %148 = vmatprep.subr.mxu0 0.0
    %149 = vmatpush1.msra.mxu0 %v122
    %150 = vmatprep.subr.mxu0 0.0
    %151 = vmatpush1.msra.mxu0 0.0
    %152 = vmatprep.subr.mxu0 0.0
    %153 = vmatpush1.msra.mxu0 0.0
    %154 = vmatprep.subr.mxu0 0.0
    %155 = vmatpush1.msra.mxu0 0.0
    %156 = vmatprep.subr.mxu0 0.0
    %157 = vmatpush1.msra.mxu0 0.0
    %158 = vmatprep.subr.mxu0 0.0
    %159 = vmatpush1.msra.mxu0 0.0
    %160 = vmatprep.subr.mxu0 0.0
    %161 = vmatpush1.msra.mxu0 0.0
    %162 = vmatprep.subr.mxu0 0.0
    %163 = vmatpush1.msra.mxu0 0.0
    %164 = vmatprep.subr.mxu0 0.0
    %165 = vmatpush1.msra.mxu0 0.0
    %166 = vmatprep.subr.mxu0 0.0
    %167 = vmatpush1.msra.mxu0 0.0
    %168 = vmatprep.subr.mxu0 0.0
    %169 = vmatpush1.msra.mxu0 0.0
    %170 = vmatprep.subr.mxu0 0.0
    %171 = vmatpush1.msra.mxu0 0.0
    %172 = vmatprep.subr.mxu0 0.0
    %173 = vmatpush1.msra.mxu0 0.0
    %174 = vmatprep.subr.mxu0 0.0
    %175 = vmatpush1.msra.mxu0 0.0
    %176 = vmatprep.subr.mxu0 0.0
    %177 = vmatpush1.msra.mxu0 0.0
    %178 = vmatprep.subr.mxu0 0.0
    %179 = vmatpush1.msra.mxu0 0.0
    %180 = vmatprep.subr.mxu0 0.0
    %181 = vmatpush1.msra.mxu0 0.0
    %182 = vmatprep.subr.mxu0 0.0
    %183 = vmatpush1.msra.mxu0 0.0
    %184 = vmatprep.subr.mxu0 0.0
    %185 = vmatpush1.msra.mxu0 0.0
    %186 = vmatprep.subr.mxu0 0.0
    %187 = vmatpush1.msra.mxu0 0.0
    %188 = vmatprep.subr.mxu0 0.0
    %189 = vmatpush1.msra.mxu0 0.0
    %190 = vmatprep.subr.mxu0 0.0
    %191 = vmatpush1.msra.mxu0 0.0
    %192 = vmatprep.subr.mxu0 0.0
    %193 = vmatpush1.msra.mxu0 0.0
    %194 = vmatprep.subr.mxu0 0.0
    %195 = vmatpush1.msra.mxu0 0.0
    %196 = vmatprep.subr.mxu0 0.0
    %197 = vmatpush1.msra.mxu0 0.0
    %198 = vmatprep.mubr.f32.mxu0 0.0
    %199 = vmatmul.mubr.f32.gmra.mrb[0].mxu0 %v132
    %v200 = vpop.f32.mrb[0].mxu0
    %v201 = vadd.f32 %v128, %v200
    %v202 = vpop.f32.mrb[0].mxu0
    %203 = vdwg.mxu0
    %v204 = vmul.f32 %v201, 0.01
    %v205 = vmax.f32 %v201, %v204
    %v206 = vld [vmem:[%s5] sm:$0xff]
    %v207 = vld [vmem:[%s5 + $0x8] sm:$0xff]
    %v208 = vld [vmem:[%s6] sm:$0x1]
    %v210 = vlaneseq
    %v211 = vshrl.u32 %v210, 7
    %v212 = vsub.s32 0, %v211
    %v213 = vrot.slane %v208, %v212
    %vm215 = vcmask 130048
    %v217 = vsel %vm215, %v205, 0
    %219 = vmatprep.subr.mxu0 0.0
    %220 = vmatpush1.msra.mxu0 %v206
    %221 = vmatprep.subr.mxu0 0.0
    %222 = vmatpush1.msra.mxu0 %v207
    %223 = vmatprep.subr.mxu0 0.0
    %224 = vmatpush1.msra.mxu0 0.0
    %225 = vmatprep.subr.mxu0 0.0
    %226 = vmatpush1.msra.mxu0 0.0
    %227 = vmatprep.subr.mxu0 0.0
    %228 = vmatpush1.msra.mxu0 0.0
    %229 = vmatprep.subr.mxu0 0.0
    %230 = vmatpush1.msra.mxu0 0.0
    %231 = vmatprep.subr.mxu0 0.0
    %232 = vmatpush1.msra.mxu0 0.0
    %233 = vmatprep.subr.mxu0 0.0
    %234 = vmatpush1.msra.mxu0 0.0
    %235 = vmatprep.subr.mxu0 0.0
    %236 = vmatpush1.msra.mxu0 0.0
    %237 = vmatprep.subr.mxu0 0.0
    %238 = vmatpush1.msra.mxu0 0.0
    %239 = vmatprep.subr.mxu0 0.0
    %240 = vmatpush1.msra.mxu0 0.0
    %241 = vmatprep.subr.mxu0 0.0
    %242 = vmatpush1.msra.mxu0 0.0
    %243 = vmatprep.subr.mxu0 0.0
    %244 = vmatpush1.msra.mxu0 0.0
    %245 = vmatprep.subr.mxu0 0.0
    %246 = vmatpush1.msra.mxu0 0.0
    %247 = vmatprep.subr.mxu0 0.0
    %248 = vmatpush1.msra.mxu0 0.0
    %249 = vmatprep.subr.mxu0 0.0
    %250 = vmatpush1.msra.mxu0 0.0
    %251 = vmatprep.subr.mxu0 0.0
    %252 = vmatpush1.msra.mxu0 0.0
    %253 = vmatprep.subr.mxu0 0.0
    %254 = vmatpush1.msra.mxu0 0.0
    %255 = vmatprep.subr.mxu0 0.0
    %256 = vmatpush1.msra.mxu0 0.0
    %257 = vmatprep.subr.mxu0 0.0
    %258 = vmatpush1.msra.mxu0 0.0
    %259 = vmatprep.subr.mxu0 0.0
    %260 = vmatpush1.msra.mxu0 0.0
    %261 = vmatprep.subr.mxu0 0.0
    %262 = vmatpush1.msra.mxu0 0.0
    %263 = vmatprep.subr.mxu0 0.0
    %264 = vmatpush1.msra.mxu0 0.0
    %265 = vmatprep.subr.mxu0 0.0
    %266 = vmatpush1.msra.mxu0 0.0
    %267 = vmatprep.subr.mxu0 0.0
    %268 = vmatpush1.msra.mxu0 0.0
    %269 = vmatprep.subr.mxu0 0.0
    %270 = vmatpush1.msra.mxu0 0.0
    %271 = vmatprep.subr.mxu0 0.0
    %272 = vmatpush1.msra.mxu0 0.0
    %273 = vmatprep.subr.mxu0 0.0
    %274 = vmatpush1.msra.mxu0 0.0
    %275 = vmatprep.subr.mxu0 0.0
    %276 = vmatpush1.msra.mxu0 0.0
    %277 = vmatprep.subr.mxu0 0.0
    %278 = vmatpush1.msra.mxu0 0.0
    %279 = vmatprep.subr.mxu0 0.0
    %280 = vmatpush1.msra.mxu0 0.0
    %281 = vmatprep.subr.mxu0 0.0
    %282 = vmatpush1.msra.mxu0 0.0
    %283 = vmatprep.mubr.f32.mxu0 0.0
    %284 = vmatmul.mubr.f32.gmra.mrb[0].mxu0 %v217
    %v285 = vpop.f32.mrb[0].mxu0
    %v286 = vadd.f32 %v213, %v285
    %v287 = vpop.f32.mrb[0].mxu0
    %288 = vdwg.mxu0
    %vm289 = vcmask 80896
    %v290 = vsel %vm289, %v286, -inf
    %291 = vmax.xlane.f32.xlu0 %v290
    %v292 = vpop.xlane.xlu0 %291
    %v293 = vsub.f32 %v286, %v292
    %v294 = vmul.f32 %v293, 1.442695
    %v295 = vpow.pop %v294
    %v296 = vsel %vm289, %v295, 0.0
    %297 = vadd.xlane.f32.xlu0 %v296
    %v298 = vpop.xlane.xlu0 %297
    %v299 = vrcp.pop %v298
    %v300 = vmul.f32 %v295, %v299
    %301 = vst.msk [vmem:[#allocation2] sm:$0xff] %vm289, %v300
    // Predicated region
    $region30: #{tpu_custom_call.1} parent=1 // pred_check
      _
    $region31: #{tpu_custom_call.1} parent=1 // pred_check_branch
      %303 = sbr.rel (0) target = $region33
    $region32: #{tpu_custom_call.1} parent=1 // pred_region
      %s305 = ssub.s32 128, 128
      %306 = vsyncadd [#allocation3], %s305
      %s308 = sshll.u32 [#allocation2], 4
      %s309 = int_to_ptr.vmem [resolvable:$true] %s308
      %311 = dma.vmem_to_hbm [thread:$0]  %s309, 128, %s7, [#allocation3]
    $region33: #{tpu_custom_call.1} parent=1 // pred_fallthru
      _
    // Predicated region
    $region34: #{tpu_custom_call.1} parent=1 // pred_check
      _
    $region35: #{tpu_custom_call.1} parent=1 // pred_check_branch
      %313 = sbr.rel (0) target = $region37
    $region36: #{tpu_custom_call.1} parent=1 // pred_region
      %314 = dma.done [#allocation3], 128
    $region37: #{tpu_custom_call.1} parent=1 // pred_fallthru
      _
    %315 = vsyncpa [#allocation3], 1

</llo_original>
